<compile_context>
chip_gen: v7x
topology: tpu7x:2x2x1
jax: 0.10.0
libtpu: 0.0.40
codegen_flags: <defaults>
</compile_context>

<pallas_src>
import functools
import math
import numpy as np
import jax
import jax.numpy as jnp
from jax.experimental import pallas as pl
from jax.experimental.pallas import tpu as pltpu


# ------------------------------------------------------------------
# Parameter / constant construction (glue, deterministic, plain numpy)
# ------------------------------------------------------------------
def build_sinc_filters(n_filt, filt_dim, fs):
    """Reproduces sinc_conv.__init__ + the per-forward filter construction."""
    low_freq_mel = 80.0
    high_freq_mel = 2595.0 * np.log10(1.0 + fs / 2.0 / 700.0)
    mel_points = np.linspace(low_freq_mel, high_freq_mel, n_filt)
    f_cos = 700.0 * (10.0 ** (mel_points / 2595.0) - 1.0)
    b1 = np.roll(f_cos, 1)
    b2 = np.roll(f_cos, -1)
    b1[0] = 30.0
    b2[-1] = fs / 2.0 - 100.0
    freq_scale = float(fs)
    filt_b1 = b1 / freq_scale
    filt_band = (b2 - b1) / freq_scale

    min_freq = 50.0
    min_band = 50.0
    beg = np.abs(filt_b1) + min_freq / freq_scale
    end = beg + (np.abs(filt_band) + min_band / freq_scale)

    N = filt_dim
    t_right = np.linspace(1.0, (N - 1) / 2.0, int((N - 1) / 2)) / fs
    n = np.linspace(0.0, N, N)
    window = 0.54 - 0.46 * np.cos(2.0 * math.pi * n / N)

    def sinc_np(band, t_r):
        y_right = np.sin(2.0 * math.pi * band * t_r) / (2.0 * math.pi * band * t_r)
        return np.concatenate([y_right[::-1], np.ones(1), y_right])

    filters = np.zeros((n_filt, filt_dim), dtype=np.float64)
    for i in range(n_filt):
        lp1 = 2.0 * beg[i] * sinc_np(beg[i] * freq_scale, t_right)
        lp2 = 2.0 * end[i] * sinc_np(end[i] * freq_scale, t_right)
        band_pass = lp2 - lp1
        band_pass = band_pass / np.max(band_pass)
        filters[i, :] = band_pass * window
    return filters.astype(np.float32)


def build_linear_interp_matrix(l_in, l_out):
    """M (l_in, l_out) s.t. out[..., j] = sum_i in[..., i] * M[i, j] matches
    F.interpolate(mode='linear', align_corners=False)."""
    M = np.zeros((l_in, l_out), dtype=np.float32)
    scale = l_in / l_out
    for j in range(l_out):
        src = max((j + 0.5) * scale - 0.5, 0.0)
        i0 = min(int(np.floor(src)), l_in - 1)
        i1 = min(i0 + 1, l_in - 1)
        lam = src - i0
        M[i0, j] += 1.0 - lam
        M[i1, j] += lam
    return M


def _round_up(x, m):
    return (x + m - 1) // m * m


def build_fused_operators(filters, interp_m, gamma, beta, L, C, lane=128):
    """Precompute every data-independent operator so the kernel is 4 matmuls:
         y        = x_flat @ W                    (channel-sum + conv + interp)
         g        = [s1; s2] @ R                  (per-channel BN sums, fused)
         [sc; sh] = [scale_c; shift_c] @ BC       (broadcast back to lanes)
         taps     = relu(y*sc+sh) @ [P0|P1|P2]    (pool taps + (Lp,C) layout)
    """
    K = filters.shape[1]
    Lc = L - K + 1
    Lp = (L - 1) // 2 + 1          # MaxPool1d(3, 2, padding=1) output length
    Lg = L + (L % 2)               # even per-channel lane stride
    n_valid = C * Lg
    Npad = _round_up(max(n_valid, lane), lane)
    Opad = _round_up(max(Lp * C, lane), lane)
    Cpad = _round_up(max(C, lane), lane)

    # Fused conv+interp operator per output channel:
    #   A[c, i, l] = sum_k filt[c, k] * M[i - k, l],  0 <= i - k < Lc
    A = np.zeros((C, L, L), dtype=np.float32)
    for c in range(C):
        for k in range(K):
            A[c, k:k + Lc, :] += filters[c, k] * interp_m

    # W: rows follow x.reshape(B, L*C) (row = i*C + c_in); the PyTorch conv
    # weight repeats the same kernel over input channels, so every c_in gets A.
    # Channel c of the result occupies lanes [c*Lg, c*Lg + L).
    W = np.zeros((L * C, Npad), dtype=np.float32)
    rows = np.arange(L) * C
    for c in range(C):
        for c_in in range(C):
            W[rows + c_in, c * Lg:c * Lg + L] = A[c]

    # Factored BN-stats operators (replaces the old dense Npad x Npad matrix,
    # which scaled as Npad^2 in VMEM/MACs):
    R = np.zeros((Npad, Cpad), dtype=np.float32)   # lane -> per-channel reduce
    BC = np.zeros((Cpad, Npad), dtype=np.float32)  # per-channel -> lane bcast
    for c in range(C):
        R[c * Lg:c * Lg + L, c] = 1.0
        BC[c, c * Lg:c * Lg + L] = 1.0

    # gamma / beta at the per-channel level (zero in padding columns).
    GBc = np.zeros((2, Cpad), dtype=np.float32)
    GBc[0, :C] = gamma
    GBc[1, :C] = beta

    # MaxPool1d(3,2,1) + transpose(1,2): three one-hot tap selections fused
    # column-wise into ONE constant [P_left | P_center | P_right]; each tap
    # directly produces the flattened (Lp, C) output order. Out-of-window taps
    # select nothing (-> 0), which is exact ONLY because pooling runs on
    # post-ReLU (>= 0) values -- keep the ReLU/pool coupling if this changes.
    P = np.zeros((Npad, 3 * Opad), dtype=np.float32)
    for c in range(C):
        for p in range(Lp):
            col = p * C + c
            ctr = 2 * p
            if ctr - 1 >= 0:
                P[c * Lg + ctr - 1, 0 * Opad + col] = 1.0      # left tap
            P[c * Lg + ctr, 1 * Opad + col] = 1.0              # center tap
            if ctr + 1 <= L - 1:
                P[c * Lg + ctr + 1, 2 * Opad + col] = 1.0      # right tap

    # bf16 for the big matmul constants (W tolerates it with f32 accumulate;
    # P is {0,1} so bf16 is exact). BN-stats operators stay f32.
    return (jnp.asarray(W, dtype=jnp.bfloat16),
            jnp.asarray(R, dtype=jnp.float32),
            jnp.asarray(BC, dtype=jnp.float32),
            jnp.asarray(GBc, dtype=jnp.float32),
            jnp.asarray(P, dtype=jnp.bfloat16),
            Lp, Npad, Opad)


# ------------------------------------------------------------------
# Pallas kernel: everything resident in VMEM (tiny shapes, BN needs the full
# batch anyway), single invocation, lane-dense 128-padded working layout.
# ------------------------------------------------------------------
def convlayer_kernel(x_ref, w_ref, r_ref, bc_ref, gbc_ref, p_ref, o_ref,
                     *, inv_count, eps, opad):
    # conv1d + input-channel sum + linear interpolation: one bf16 MXU matmul
    # with f32 accumulation.
    y = jnp.dot(x_ref[...], w_ref[...],
                preferred_element_type=jnp.float32)                   # (B, Npad) f32

    # Single-pass BatchNorm1d stats (training mode, biased variance).
    # s1 / s2 are stacked so ONE matmul reduces both to per-channel sums.
    # All statistics math stays in f32.
    stats = jnp.concatenate(
        [jnp.sum(y, axis=0, keepdims=True),
         jnp.sum(y * y, axis=0, keepdims=True)], axis=0)              # (2, Npad)
    g = jnp.dot(stats, r_ref[...],
                preferred_element_type=jnp.float32)                   # (2, Cpad)
    mean_c = g[0:1, :] * inv_count
    var_c = jnp.maximum(g[1:2, :] * inv_count - mean_c * mean_c, 0.0)
    scale_c = gbc_ref[0:1, :] * jax.lax.rsqrt(var_c + eps)            # gamma folded
    shift_c = gbc_ref[1:2, :] - mean_c * scale_c                      # beta  folded
    # Broadcast per-channel scale/shift back to the lane layout (one tiny matmul).
    ss = jnp.dot(jnp.concatenate([scale_c, shift_c], axis=0), bc_ref[...],
                 preferred_element_type=jnp.float32)                  # (2, Npad)

    # BN + ReLU as one FMA-shaped pass; cast to bf16 only for the {0,1} pool
    # selection matmul (exact selection, f32 accumulate).
    yr = jnp.maximum(y * ss[0:1, :] + ss[1:2, :], 0.0).astype(jnp.bfloat16)

    # MaxPool1d(3, stride=2, padding=1) + final (Lp, C) layout: ONE matmul
    # against [P_left | P_center | P_right] + a 3-way max over the slices.
    # Zero-filled boundary taps are correct only because yr >= 0 (post-ReLU).
    taps = jnp.dot(yr, p_ref[...],
                   preferred_element_type=jnp.float32)                # (B, 3*Opad)
    o_ref[...] = jnp.maximum(
        jnp.maximum(taps[:, 0:opad], taps[:, opad:2 * opad]),
        taps[:, 2 * opad:3 * opad])                                   # (B, Opad)


def make_conv_layer(filters, interp_m, gamma, beta, L, C, eps=1e-5):
    """Build the fused operators ONCE and return a jitted forward(x_blc).
    Constants stay device-resident as jit closure constants (no per-call numpy
    rebuild / re-upload)."""
    W, R, BC, GBc, P, Lp, Npad, Opad = build_fused_operators(
        np.asarray(filters), np.asarray(interp_m),
        np.asarray(gamma), np.asarray(beta), L, C)

    const_bytes = sum(int(np.prod(a.shape)) * a.dtype.itemsize
                      for a in (W, R, BC, GBc, P))

    @jax.jit
    def forward(x_blc):
        B = x_blc.shape[0]
        # NOTE: inv_count/eps are baked per (B, L); any shape change recompiles
        # anyway, so this does not add extra recompiles.
        kernel = functools.partial(convlayer_kernel,
                                   inv_count=1.0 / float(B * L),
                                   eps=float(eps), opad=Opad)

        # Contiguous reshape only — the permute(0,2,1) is folded into W.
        x_flat = x_blc.reshape(B, L * C).astype(jnp.bfloat16)

        # VMEM budget derived from the actual footprint (constants + I/O) with
        # 2x headroom, instead of a flat 32 MiB (v7x has 64 MiB physical).
        io_bytes = B * (L * C * 2 + Opad * 4)
        vmem_limit = int(min(max(2 * (const_bytes + io_bytes), 4 << 20), 96 << 20))

        vmem = pl.BlockSpec(memory_space=pltpu.MemorySpace.VMEM)
        out_pad = pl.pallas_call(
            kernel,
            out_shape=jax.ShapeDtypeStruct((B, Opad), jnp.float32),
            in_specs=[vmem] * 6,
            out_specs=vmem,
            compiler_params=pltpu.CompilerParams(vmem_limit_bytes=vmem_limit),
        )(x_flat, W, R, BC, GBc, P)

        # Slice off lane padding; reshape is contiguous ((Lp, C)-ordered already).
        return out_pad[:, :Lp * C].reshape(B, Lp, C)

    return forward


# ------------------------------------------------------------------
# Pure-jnp reference replicating the original op sequence (self-check)
# ------------------------------------------------------------------
def reference_forward(x_blc, filters, interp_m, gamma, beta, eps=1e-5):
    B, L, C = x_blc.shape
    K = filters.shape[1]
    Lc = L - K + 1
    x_bcl = jnp.transpose(x_blc, (0, 2, 1)).astype(jnp.float32)       # (B, C, L)
    s = jnp.sum(x_bcl, axis=1)                                        # (B, L)
    conv = jnp.stack(
        [sum(filters[c, k] * s[:, k:k + Lc] for k in range(K)) for c in range(C)],
        axis=1)                                                       # (B, C, Lc)
    y = jnp.einsum('bcp,pl->bcl', conv, interp_m,
                   precision=jax.lax.Precision.HIGHEST)               # (B, C, L)
    mean = jnp.mean(y, axis=(0, 2), keepdims=True)
    var = jnp.mean((y - mean) ** 2, axis=(0, 2), keepdims=True)
    y = (y - mean) / jnp.sqrt(var + eps)
    y = y * gamma[None, :, None] + beta[None, :, None]
    y = jnp.maximum(y, 0.0)
    Lp = (L - 1) // 2 + 1
    ypad = jnp.pad(y, ((0, 0), (0, 0), (1, 1)), constant_values=-jnp.inf)
    pooled = jnp.stack([jnp.max(ypad[:, :, 2 * p:2 * p + 3], axis=2)
                        for p in range(Lp)], axis=2)                  # (B, C, Lp)
    return jnp.transpose(pooled, (0, 2, 1))                           # (B, Lp, C)


if __name__ == "__main__":
    # configs.d_model = 4 ; ConvLayer hard-codes sinc_conv(d_model, 7, 3)
    B, L, d_model = 2, 16, 4
    Filt_dim, fs = 7, 3

    key = jax.random.PRNGKey(0)
    x = jax.random.normal(key, (B, L, d_model), dtype=jnp.float32)

    filters_np = build_sinc_filters(d_model, Filt_dim, fs)                    # (C, 7)
    interp_np = build_linear_interp_matrix(L - Filt_dim + 1, L)               # (10, 16)
    gamma_np = np.ones((d_model,), np.float32)   # BatchNorm1d default weight
    beta_np = np.zeros((d_model,), np.float32)   # BatchNorm1d default bias

    forward = make_conv_layer(filters_np, interp_np, gamma_np, beta_np, L, d_model)

    out = forward(x)
    out = jax.block_until_ready(out)

    Lp = (L - 1) // 2 + 1
    assert out.shape == (B, Lp, d_model), out.shape
    assert bool(jnp.all(jnp.isfinite(out)))

    ref = reference_forward(x, jnp.asarray(filters_np), jnp.asarray(interp_np),
                            jnp.asarray(gamma_np), jnp.asarray(beta_np))
    assert bool(jnp.allclose(out, ref, atol=5e-2, rtol=5e-2)), (
        "max abs diff = %g" % float(jnp.max(jnp.abs(out - ref))))

    print("KERNEL_OK")
</pallas_src>

<mosaic_0001>
module attributes {stable_mosaic.version = 11 : i64} {
  func.func @convlayer_kernel(%arg0: memref<2x64xbf16, #tpu.memory_space<vmem>>, %arg1: memref<64x128xbf16, #tpu.memory_space<vmem>>, %arg2: memref<128x128xf32, #tpu.memory_space<vmem>>, %arg3: memref<128x128xf32, #tpu.memory_space<vmem>>, %arg4: memref<2x128xf32, #tpu.memory_space<vmem>>, %arg5: memref<128x384xbf16, #tpu.memory_space<vmem>>, %arg6: memref<2x128xf32, #tpu.memory_space<vmem>>) attributes {dimension_semantics = [], scalar_prefetch = 0 : i64, scratch_operands = 0 : i64, tpu.core_type = #tpu.core_type<tc>} {
    %c0 = arith.constant 0 : index
    %c0_0 = arith.constant 0 : index
    %0 = vector.load %arg0[%c0, %c0_0] : memref<2x64xbf16, #tpu.memory_space<vmem>>, vector<2x64xbf16>
    %c0_1 = arith.constant 0 : index
    %c0_2 = arith.constant 0 : index
    %1 = vector.load %arg1[%c0_1, %c0_2] : memref<64x128xbf16, #tpu.memory_space<vmem>>, vector<64x128xbf16>
    %cst = arith.constant dense<0.000000e+00> : vector<2x128xf32>
    %2 = tpu.matmul %0, %1, %cst {dimension_numbers = #tpu.dot_dimension_numbers<[1], [0], [0], [1], [0, 0, 1, 1], [], []>} : vector<2x64xbf16>, vector<64x128xbf16>, vector<2x128xf32> -> vector<2x128xf32>
    %cst_3 = arith.constant dense<0.000000e+00> : vector<128xf32>
    %3 = vector.multi_reduction <add>, %2, %cst_3 [0] : vector<2x128xf32> to vector<128xf32>
    %4 = vector.shape_cast %3 : vector<128xf32> to vector<1x128xf32>
    %5 = arith.mulf %2, %2 : vector<2x128xf32>
    %cst_4 = arith.constant dense<0.000000e+00> : vector<128xf32>
    %6 = vector.multi_reduction <add>, %5, %cst_4 [0] : vector<2x128xf32> to vector<128xf32>
    %7 = vector.shape_cast %6 : vector<128xf32> to vector<1x128xf32>
    %8 = tpu.concatenate %4, %7 in 0 : vector<1x128xf32>, vector<1x128xf32> -> vector<2x128xf32>
    %c0_5 = arith.constant 0 : index
    %c0_6 = arith.constant 0 : index
    %9 = vector.load %arg2[%c0_5, %c0_6] : memref<128x128xf32, #tpu.memory_space<vmem>>, vector<128x128xf32>
    %cst_7 = arith.constant dense<0.000000e+00> : vector<2x128xf32>
    %10 = tpu.matmul %8, %9, %cst_7 {dimension_numbers = #tpu.dot_dimension_numbers<[1], [0], [0], [1], [0, 0, 1, 1], [], []>} : vector<2x128xf32>, vector<128x128xf32>, vector<2x128xf32> -> vector<2x128xf32>
    %11 = vector.extract_strided_slice %10 {offsets = [0, 0], sizes = [1, 128], strides = [1, 1]} : vector<2x128xf32> to vector<1x128xf32>
    %cst_8 = arith.constant 3.125000e-02 : f32
    %12 = vector.broadcast %cst_8 : f32 to vector<1x128xf32>
    %13 = arith.mulf %11, %12 : vector<1x128xf32>
    %14 = vector.extract_strided_slice %10 {offsets = [1, 0], sizes = [1, 128], strides = [1, 1]} : vector<2x128xf32> to vector<1x128xf32>
    %cst_9 = arith.constant 3.125000e-02 : f32
    %15 = vector.broadcast %cst_9 : f32 to vector<1x128xf32>
    %16 = arith.mulf %14, %15 : vector<1x128xf32>
    %17 = arith.mulf %13, %13 : vector<1x128xf32>
    %18 = arith.subf %16, %17 : vector<1x128xf32>
    %cst_10 = arith.constant 0.000000e+00 : f32
    %19 = vector.broadcast %cst_10 : f32 to vector<1x128xf32>
    %20 = arith.maximumf %18, %19 : vector<1x128xf32>
    %c0_11 = arith.constant 0 : index
    %c0_12 = arith.constant 0 : index
    %21 = vector.load %arg4[%c0_11, %c0_12] : memref<2x128xf32, #tpu.memory_space<vmem>>, vector<1x128xf32>
    %cst_13 = arith.constant 9.99999974E-6 : f32
    %22 = vector.broadcast %cst_13 : f32 to vector<1x128xf32>
    %23 = arith.addf %20, %22 : vector<1x128xf32>
    %24 = math.rsqrt %23 : vector<1x128xf32>
    %25 = arith.mulf %21, %24 : vector<1x128xf32>
    %c1 = arith.constant 1 : index
    %c0_14 = arith.constant 0 : index
    %26 = vector.load %arg4[%c1, %c0_14] : memref<2x128xf32, #tpu.memory_space<vmem>>, vector<1x128xf32>
    %27 = arith.mulf %13, %25 : vector<1x128xf32>
    %28 = arith.subf %26, %27 : vector<1x128xf32>
    %29 = tpu.concatenate %25, %28 in 0 : vector<1x128xf32>, vector<1x128xf32> -> vector<2x128xf32>
    %c0_15 = arith.constant 0 : index
    %c0_16 = arith.constant 0 : index
    %30 = vector.load %arg3[%c0_15, %c0_16] : memref<128x128xf32, #tpu.memory_space<vmem>>, vector<128x128xf32>
    %cst_17 = arith.constant dense<0.000000e+00> : vector<2x128xf32>
    %31 = tpu.matmul %29, %30, %cst_17 {dimension_numbers = #tpu.dot_dimension_numbers<[1], [0], [0], [1], [0, 0, 1, 1], [], []>} : vector<2x128xf32>, vector<128x128xf32>, vector<2x128xf32> -> vector<2x128xf32>
    %32 = vector.extract_strided_slice %31 {offsets = [0, 0], sizes = [1, 128], strides = [1, 1]} : vector<2x128xf32> to vector<1x128xf32>
    %33 = vector.broadcast %32 : vector<1x128xf32> to vector<2x128xf32>
    %34 = arith.mulf %2, %33 : vector<2x128xf32>
    %35 = vector.extract_strided_slice %31 {offsets = [1, 0], sizes = [1, 128], strides = [1, 1]} : vector<2x128xf32> to vector<1x128xf32>
    %36 = vector.broadcast %35 : vector<1x128xf32> to vector<2x128xf32>
    %37 = arith.addf %34, %36 : vector<2x128xf32>
    %cst_18 = arith.constant 0.000000e+00 : f32
    %38 = vector.broadcast %cst_18 : f32 to vector<2x128xf32>
    %39 = arith.maximumf %37, %38 : vector<2x128xf32>
    %40 = arith.truncf %39 : vector<2x128xf32> to vector<2x128xbf16>
    %c0_19 = arith.constant 0 : index
    %c0_20 = arith.constant 0 : index
    %41 = vector.load %arg5[%c0_19, %c0_20] : memref<128x384xbf16, #tpu.memory_space<vmem>>, vector<128x384xbf16>
    %cst_21 = arith.constant dense<0.000000e+00> : vector<2x384xf32>
    %42 = tpu.matmul %40, %41, %cst_21 {dimension_numbers = #tpu.dot_dimension_numbers<[1], [0], [0], [1], [0, 0, 1, 1], [], []>} : vector<2x128xbf16>, vector<128x384xbf16>, vector<2x384xf32> -> vector<2x384xf32>
    %43 = vector.extract_strided_slice %42 {offsets = [0, 0], sizes = [2, 128], strides = [1, 1]} : vector<2x384xf32> to vector<2x128xf32>
    %44 = vector.extract_strided_slice %42 {offsets = [0, 128], sizes = [2, 128], strides = [1, 1]} : vector<2x384xf32> to vector<2x128xf32>
    %45 = arith.maximumf %43, %44 : vector<2x128xf32>
    %46 = vector.extract_strided_slice %42 {offsets = [0, 256], sizes = [2, 128], strides = [1, 1]} : vector<2x384xf32> to vector<2x128xf32>
    %47 = arith.maximumf %45, %46 : vector<2x128xf32>
    %c0_22 = arith.constant 0 : index
    %c0_23 = arith.constant 0 : index
    %48 = vector.load %arg6[%c0_22, %c0_23] : memref<2x128xf32, #tpu.memory_space<vmem>>, vector<2x128xf32>
    tpu.vector_store %arg6[%c0_22, %c0_23], %47 {strides = array<i32>} : memref<2x128xf32, #tpu.memory_space<vmem>>, vector<2x128xf32>,
    return
  }
}

</mosaic_0001>

<llo_original>
// kernel: forward.1
$region0: #{forward.1}
  #allocation0 [shape = 'u32[]', space=smem, size = 0x4, offset = 0x4, fixed_abs, tag = 'smem constant byte address 0x4 - core index']
  #allocation1 [shape = 'u32[144,128]{1,0:T(1,128)}', space=vmem, size = 0x12000, scoped, tag = 'internal scratch']
  %s0 = inlined_call_operand.vmem [shape: bf16[2,64], index: 0, kind: input, shape index: {}]
  %s1 = inlined_call_operand.vmem [shape: bf16[64,128], index: 1, kind: input, shape index: {}]
  %s2 = inlined_call_operand.vmem [shape: f32[128,128], index: 2, kind: input, shape index: {}]
  %s3 = inlined_call_operand.vmem [shape: f32[128,128], index: 3, kind: input, shape index: {}]
  %s4 = inlined_call_operand.vmem [shape: f32[2,128], index: 4, kind: input, shape index: {}]
  %s5 = inlined_call_operand.vmem [shape: bf16[128,384], index: 5, kind: input, shape index: {}]
  %s6 = inlined_call_operand.vmem [shape: f32[2,128], index: 6, kind: output, shape index: {}]
  %s7 = sld [smem:[#allocation0]]
  $region34: #{forward.1} parent=0
    _
  %s9 = ssub.s32 1, %s7
  %s10 = scalar_select 0, %s9, %s7
  // Predicated region
  $region2: #{forward.1} parent=0 // pred_check
    _
  $region3: #{forward.1} parent=0 // pred_check_branch
    %12 = sbr.rel (0) target = $region5
  $region4: #{forward.1} parent=0 // pred_region
    _
  $region5: #{forward.1} parent=0 // pred_fallthru
    _
  // Predicated region
  $region6: #{forward.1} parent=0 // pred_check
    _
  $region7: #{forward.1} parent=0 // pred_check_branch
    %14 = sbr.rel (0) target = $region9
  $region8: #{forward.1} parent=0 // pred_region
    _
  $region9: #{forward.1} parent=0 // pred_fallthru
    _
  // Predicated region
  $region10: #{forward.1} parent=0 // pred_check
    _
  $region11: #{forward.1} parent=0 // pred_check_branch
    %16 = sbr.rel (0) target = $region13
  $region12: #{forward.1} parent=0 // pred_region
    _
  $region13: #{forward.1} parent=0 // pred_fallthru
    _
  // Predicated region
  $region14: #{forward.1} parent=0 // pred_check
    _
  $region15: #{forward.1} parent=0 // pred_check_branch
    %18 = sbr.rel (0) target = $region17
  $region16: #{forward.1} parent=0 // pred_region
    _
  $region17: #{forward.1} parent=0 // pred_fallthru
    _
  // Predicated region
  $region18: #{forward.1} parent=0 // pred_check
    _
  $region19: #{forward.1} parent=0 // pred_check_branch
    %20 = sbr.rel (0) target = $region21
  $region20: #{forward.1} parent=0 // pred_region
    _
  $region21: #{forward.1} parent=0 // pred_fallthru
    _
  // Predicated region
  $region22: #{forward.1} parent=0 // pred_check
    _
  $region23: #{forward.1} parent=0 // pred_check_branch
    %22 = sbr.rel (0) target = $region25
  $region24: #{forward.1} parent=0 // pred_region
    _
  $region25: #{forward.1} parent=0 // pred_fallthru
    _
  %v24 = vld [vmem:[%s0] sm:$0x1]
  %v25 = vld [vmem:[%s1] sm:$0xf]
  %v26 = vld [vmem:[%s1 + $0x4] sm:$0xf]
  %v27 = vld [vmem:[%s1 + $0x8] sm:$0xf]
  %v28 = vld [vmem:[%s1 + $0xc] sm:$0xf]
  %v29 = vld [vmem:[%s1 + $0x10] sm:$0xf]
  %v30 = vld [vmem:[%s1 + $0x14] sm:$0xf]
  %v31 = vld [vmem:[%s1 + $0x18] sm:$0xf]
  %v32 = vld [vmem:[%s1 + $0x1c] sm:$0xf]
  %v41 = vunpack.c.l.b16 %v25
  %v42 = vunpack.c.l.b16 %v26
  %v43 = vunpack.c.l.b16 %v27
  %v44 = vunpack.c.l.b16 %v28
  %v45 = vunpack.c.l.b16 %v29
  %v46 = vunpack.c.l.b16 %v30
  %v47 = vunpack.c.l.b16 %v31
  %v48 = vunpack.c.l.b16 %v32
  %v49 = vpack.c.b16 %v42, %v41
  %v50 = vpack.c.b16 %v44, %v43
  %v51 = vpack.c.b16 %v46, %v45
  %v52 = vpack.c.b16 %v48, %v47
  %vm57 = vcmask 523264
  %v59 = vsel %vm57, %v24, 0
  %61 = vmatprep.subr.bf16.mxu0 0
  %62 = vmatpush1.bf16.msra.mxu0 %v49
  %63 = vmatprep.subr.bf16.mxu0 0
  %64 = vmatpush1.bf16.msra.mxu0 %v50
  %65 = vmatprep.subr.bf16.mxu0 0
  %66 = vmatpush1.bf16.msra.mxu0 %v51
  %67 = vmatprep.subr.bf16.mxu0 0
  %68 = vmatpush1.bf16.msra.mxu0 %v52
  %69 = vmatprep.subr.bf16.mxu0 0
  %70 = vmatpush1.bf16.msra.mxu0 0
  %71 = vmatprep.subr.bf16.mxu0 0
  %72 = vmatpush1.bf16.msra.mxu0 0
  %73 = vmatprep.subr.bf16.mxu0 0
  %74 = vmatpush1.bf16.msra.mxu0 0
  %75 = vmatprep.subr.bf16.mxu0 0
  %76 = vmatpush1.bf16.msra.mxu0 0
  %77 = vmatprep.subr.bf16.mxu0 0
  %78 = vmatpush1.bf16.msra.mxu0 0
  %79 = vmatprep.subr.bf16.mxu0 0
  %80 = vmatpush1.bf16.msra.mxu0 0
  %81 = vmatprep.subr.bf16.mxu0 0
  %82 = vmatpush1.bf16.msra.mxu0 0
  %83 = vmatprep.subr.bf16.mxu0 0
  %84 = vmatpush1.bf16.msra.mxu0 0
  %85 = vmatprep.subr.bf16.mxu0 0
  %86 = vmatpush1.bf16.msra.mxu0 0
  %87 = vmatprep.subr.bf16.mxu0 0
  %88 = vmatpush1.bf16.msra.mxu0 0
  %89 = vmatprep.subr.bf16.mxu0 0
  %90 = vmatpush1.bf16.msra.mxu0 0
  %91 = vmatprep.subr.bf16.mxu0 0
  %92 = vmatpush1.bf16.msra.mxu0 0
  %93 = vmatprep.mubr.bf16.mxu0 0
  %94 = vmatmul.mubr.bf16.gmra.mrb[0].mxu0 %v59
  %v95 = vpop.f32.mrb[0].mxu0
  %v96 = vadd.f32 0.0, %v95
  %v97 = vpop.f32.mrb[0].mxu0
  %v98 = vpop.f32.mrb[0].mxu0
  %v99 = vpop.f32.mrb[0].mxu0
  %100 = vdwg.mxu0
  %vm101 = vcmask 1041408
  %v102 = vsel %vm101, %v96, 0.0
  %v103 = vrot.slane %v102, 4
  %v104 = vadd.f32 %v102, %v103
  %v105 = vrot.slane %v104, 2
  %v106 = vadd.f32 %v104, %v105
  %v107 = vrot.slane %v106, 1
  %v108 = vadd.f32 %v106, %v107
  %v109 = vmul.f32 %v96, %v96
  %v110 = vsel %vm101, %v109, 0.0
  %v111 = vrot.slane %v110, 4
  %v112 = vadd.f32 %v110, %v111
  %v113 = vrot.slane %v112, 2
  %v114 = vadd.f32 %v112, %v113
  %v115 = vrot.slane %v114, 1
  %v116 = vadd.f32 %v114, %v115
  %vm117 = vcmask 1040384
  %v118 = vsel %vm117, %v108, %v116
  %v119 = vld [vmem:[%s2] sm:$0xff]
  %v120 = vld [vmem:[%s2 + $0x8] sm:$0xff]
  %v121 = vld [vmem:[%s2 + $0x10] sm:$0xff]
  %v122 = vld [vmem:[%s2 + $0x18] sm:$0xff]
  %v123 = vld [vmem:[%s2 + $0x20] sm:$0xff]
  %v124 = vld [vmem:[%s2 + $0x28] sm:$0xff]
  %v125 = vld [vmem:[%s2 + $0x30] sm:$0xff]
  %v126 = vld [vmem:[%s2 + $0x38] sm:$0xff]
  %v127 = vld [vmem:[%s2 + $0x40] sm:$0xff]
  %v128 = vld [vmem:[%s2 + $0x48] sm:$0xff]
  %v129 = vld [vmem:[%s2 + $0x50] sm:$0xff]
  %v130 = vld [vmem:[%s2 + $0x58] sm:$0xff]
  %v131 = vld [vmem:[%s2 + $0x60] sm:$0xff]
  %v132 = vld [vmem:[%s2 + $0x68] sm:$0xff]
  %v133 = vld [vmem:[%s2 + $0x70] sm:$0xff]
  %v134 = vld [vmem:[%s2 + $0x78] sm:$0xff]
  %135 = vmatprep.subr.mxu0 0.0
  %136 = vmatpush1.msra.mxu0 %v119
  %137 = vmatprep.subr.mxu0 0.0
  %138 = vmatpush1.msra.mxu0 %v120
  %139 = vmatprep.subr.mxu0 0.0
  %140 = vmatpush1.msra.mxu0 %v121
  %141 = vmatprep.subr.mxu0 0.0
  %142 = vmatpush1.msra.mxu0 %v122
  %143 = vmatprep.subr.mxu0 0.0
  %144 = vmatpush1.msra.mxu0 %v123
  %145 = vmatprep.subr.mxu0 0.0
  %146 = vmatpush1.msra.mxu0 %v124
  %147 = vmatprep.subr.mxu0 0.0
  %148 = vmatpush1.msra.mxu0 %v125
  %149 = vmatprep.subr.mxu0 0.0
  %150 = vmatpush1.msra.mxu0 %v126
  %151 = vmatprep.subr.mxu0 0.0
  %152 = vmatpush1.msra.mxu0 %v127
  %153 = vmatprep.subr.mxu0 0.0
  %154 = vmatpush1.msra.mxu0 %v128
  %155 = vmatprep.subr.mxu0 0.0
  %156 = vmatpush1.msra.mxu0 %v129
  %157 = vmatprep.subr.mxu0 0.0
  %158 = vmatpush1.msra.mxu0 %v130
  %159 = vmatprep.subr.mxu0 0.0
  %160 = vmatpush1.msra.mxu0 %v131
  %161 = vmatprep.subr.mxu0 0.0
  %162 = vmatpush1.msra.mxu0 %v132
  %163 = vmatprep.subr.mxu0 0.0
  %164 = vmatpush1.msra.mxu0 %v133
  %165 = vmatprep.subr.mxu0 0.0
  %166 = vmatpush1.msra.mxu0 %v134
  %167 = vmatprep.subr.mxu0 0.0
  %168 = vmatpush1.msra.mxu0 0.0
  %169 = vmatprep.subr.mxu0 0.0
  %170 = vmatpush1.msra.mxu0 0.0
  %171 = vmatprep.subr.mxu0 0.0
  %172 = vmatpush1.msra.mxu0 0.0
  %173 = vmatprep.subr.mxu0 0.0
  %174 = vmatpush1.msra.mxu0 0.0
  %175 = vmatprep.subr.mxu0 0.0
  %176 = vmatpush1.msra.mxu0 0.0
  %177 = vmatprep.subr.mxu0 0.0
  %178 = vmatpush1.msra.mxu0 0.0
  %179 = vmatprep.subr.mxu0 0.0
  %180 = vmatpush1.msra.mxu0 0.0
  %181 = vmatprep.subr.mxu0 0.0
  %182 = vmatpush1.msra.mxu0 0.0
  %183 = vmatprep.subr.mxu0 0.0
  %184 = vmatpush1.msra.mxu0 0.0
  %185 = vmatprep.subr.mxu0 0.0
  %186 = vmatpush1.msra.mxu0 0.0
  %187 = vmatprep.subr.mxu0 0.0
  %188 = vmatpush1.msra.mxu0 0.0
  %189 = vmatprep.subr.mxu0 0.0
  %190 = vmatpush1.msra.mxu0 0.0
  %191 = vmatprep.subr.mxu0 0.0
  %192 = vmatpush1.msra.mxu0 0.0
  %193 = vmatprep.subr.mxu0 0.0
  %194 = vmatpush1.msra.mxu0 0.0
  %195 = vmatprep.subr.mxu0 0.0
  %196 = vmatpush1.msra.mxu0 0.0
  %197 = vmatprep.subr.mxu0 0.0
  %198 = vmatpush1.msra.mxu0 0.0
  %199 = vmatprep.mubr.f32.mxu0 0.0
  %200 = vmatmul.mubr.f32.gmra.mrb[0].mxu0 %v118
  %v201 = vpop.f32.mrb[0].mxu0
  %v202 = vadd.f32 0.0, %v201
  %v203 = vpop.f32.mrb[0].mxu0
  %204 = vdwg.mxu0
  %v205 = vmul.f32 %v202, 0.03125
  %v206 = vmul.f32 %v205, %v205
  %v208 = vrot.slane %v206, 7
  %v210 = vsub.f32 %v205, %v208
  %v211 = vmax.f32 %v210, 0.0
  %v212 = vld [vmem:[%s4] sm:$0x1]
  %v213 = vadd.f32 %v211, 1e-05
  %v214 = vrsqrt.pop %v213
  %v216 = vrot.slane %v214, 1
  %v218 = vmul.f32 %v212, %v216
  %v219 = vld [vmem:[%s4 + $0x1] sm:$0x1]
  %v220 = vmul.f32 %v205, %v218
  %v221 = vsub.f32 %v219, %v220
  %v223 = vrot.slane %v221, 7
  %v225 = vsel %vm117, %v218, %v223
  %v226 = vld [vmem:[%s3] sm:$0xff]
  %v227 = vld [vmem:[%s3 + $0x8] sm:$0xff]
  %v228 = vld [vmem:[%s3 + $0x10] sm:$0xff]
  %v229 = vld [vmem:[%s3 + $0x18] sm:$0xff]
  %v230 = vld [vmem:[%s3 + $0x20] sm:$0xff]
  %v231 = vld [vmem:[%s3 + $0x28] sm:$0xff]
  %v232 = vld [vmem:[%s3 + $0x30] sm:$0xff]
  %v233 = vld [vmem:[%s3 + $0x38] sm:$0xff]
  %v234 = vld [vmem:[%s3 + $0x40] sm:$0xff]
  %v235 = vld [vmem:[%s3 + $0x48] sm:$0xff]
  %v236 = vld [vmem:[%s3 + $0x50] sm:$0xff]
  %v237 = vld [vmem:[%s3 + $0x58] sm:$0xff]
  %v238 = vld [vmem:[%s3 + $0x60] sm:$0xff]
  %v239 = vld [vmem:[%s3 + $0x68] sm:$0xff]
  %v240 = vld [vmem:[%s3 + $0x70] sm:$0xff]
  %v241 = vld [vmem:[%s3 + $0x78] sm:$0xff]
  %242 = vmatprep.subr.mxu0 0.0
  %243 = vmatpush1.msra.mxu0 %v226
  %244 = vmatprep.subr.mxu0 0.0
  %245 = vmatpush1.msra.mxu0 %v227
  %246 = vmatprep.subr.mxu0 0.0
  %247 = vmatpush1.msra.mxu0 %v228
  %248 = vmatprep.subr.mxu0 0.0
  %249 = vmatpush1.msra.mxu0 %v229
  %250 = vmatprep.subr.mxu0 0.0
  %251 = vmatpush1.msra.mxu0 %v230
  %252 = vmatprep.subr.mxu0 0.0
  %253 = vmatpush1.msra.mxu0 %v231
  %254 = vmatprep.subr.mxu0 0.0
  %255 = vmatpush1.msra.mxu0 %v232
  %256 = vmatprep.subr.mxu0 0.0
  %257 = vmatpush1.msra.mxu0 %v233
  %258 = vmatprep.subr.mxu0 0.0
  %259 = vmatpush1.msra.mxu0 %v234
  %260 = vmatprep.subr.mxu0 0.0
  %261 = vmatpush1.msra.mxu0 %v235
  %262 = vmatprep.subr.mxu0 0.0
  %263 = vmatpush1.msra.mxu0 %v236
  %264 = vmatprep.subr.mxu0 0.0
  %265 = vmatpush1.msra.mxu0 %v237
  %266 = vmatprep.subr.mxu0 0.0
  %267 = vmatpush1.msra.mxu0 %v238
  %268 = vmatprep.subr.mxu0 0.0
  %269 = vmatpush1.msra.mxu0 %v239
  %270 = vmatprep.subr.mxu0 0.0
  %271 = vmatpush1.msra.mxu0 %v240
  %272 = vmatprep.subr.mxu0 0.0
  %273 = vmatpush1.msra.mxu0 %v241
  %274 = vmatprep.subr.mxu0 0.0
  %275 = vmatpush1.msra.mxu0 0.0
  %276 = vmatprep.subr.mxu0 0.0
  %277 = vmatpush1.msra.mxu0 0.0
  %278 = vmatprep.subr.mxu0 0.0
  %279 = vmatpush1.msra.mxu0 0.0
  %280 = vmatprep.subr.mxu0 0.0
  %281 = vmatpush1.msra.mxu0 0.0
  %282 = vmatprep.subr.mxu0 0.0
  %283 = vmatpush1.msra.mxu0 0.0
  %284 = vmatprep.subr.mxu0 0.0
  %285 = vmatpush1.msra.mxu0 0.0
  %286 = vmatprep.subr.mxu0 0.0
  %287 = vmatpush1.msra.mxu0 0.0
  %288 = vmatprep.subr.mxu0 0.0
  %289 = vmatpush1.msra.mxu0 0.0
  %290 = vmatprep.subr.mxu0 0.0
  %291 = vmatpush1.msra.mxu0 0.0
  %292 = vmatprep.subr.mxu0 0.0
  %293 = vmatpush1.msra.mxu0 0.0
  %294 = vmatprep.subr.mxu0 0.0
  %295 = vmatpush1.msra.mxu0 0.0
  %296 = vmatprep.subr.mxu0 0.0
  %297 = vmatpush1.msra.mxu0 0.0
  %298 = vmatprep.subr.mxu0 0.0
  %299 = vmatpush1.msra.mxu0 0.0
  %300 = vmatprep.subr.mxu0 0.0
  %301 = vmatpush1.msra.mxu0 0.0
  %302 = vmatprep.subr.mxu0 0.0
  %303 = vmatpush1.msra.mxu0 0.0
  %304 = vmatprep.subr.mxu0 0.0
  %305 = vmatpush1.msra.mxu0 0.0
  %306 = vmatprep.mubr.f32.mxu0 0.0
  %307 = vmatmul.mubr.f32.gmra.mrb[0].mxu0 %v225
  %v308 = vpop.f32.mrb[0].mxu0
  %v309 = vadd.f32 0.0, %v308
  %v310 = vpop.f32.mrb[0].mxu0
  %311 = vdwg.mxu0
  %v312 = vlaneseq
  %v313 = vshrl.u32 %v312, 7
  %v314 = vsub.s32 0, %v313
  %v315 = vrot.slane %v309, %v314
  %v316 = vmul.f32 %v96, %v315
  %v317 = vlaneseq
  %v318 = vshrl.u32 %v317, 7
  %v319 = vsub.s32 1, %v318
  %v320 = vrot.slane %v309, %v319
  %v321 = vadd.f32 %v316, %v320
  %v322 = vmax.f32 %v321, 0.0
  %v323 = vpack.c.bf16 %v322, %v322
  %v324 = vld [vmem:[%s5] sm:$0xff]
  %v325 = vld [vmem:[%s5 + $0x8] sm:$0xf]
  %v326 = vld [vmem:[%s5 + $0xc] sm:$0xff]
  %v327 = vld [vmem:[%s5 + $0x14] sm:$0xf]
  %v328 = vld [vmem:[%s5 + $0x18] sm:$0xff]
  %v329 = vld [vmem:[%s5 + $0x20] sm:$0xf]
  %v330 = vld [vmem:[%s5 + $0x24] sm:$0xff]
  %v331 = vld [vmem:[%s5 + $0x2c] sm:$0xf]
  %v332 = vld [vmem:[%s5 + $0x30] sm:$0xff]
  %v333 = vld [vmem:[%s5 + $0x38] sm:$0xf]
  %v334 = vld [vmem:[%s5 + $0x3c] sm:$0xff]
  %v335 = vld [vmem:[%s5 + $0x44] sm:$0xf]
  %v336 = vld [vmem:[%s5 + $0x48] sm:$0xff]
  %v337 = vld [vmem:[%s5 + $0x50] sm:$0xf]
  %v338 = vld [vmem:[%s5 + $0x54] sm:$0xff]
  %v339 = vld [vmem:[%s5 + $0x5c] sm:$0xf]
  %v340 = vld [vmem:[%s5 + $0x60] sm:$0xff]
  %v341 = vld [vmem:[%s5 + $0x68] sm:$0xf]
  %v342 = vld [vmem:[%s5 + $0x6c] sm:$0xff]
  %v343 = vld [vmem:[%s5 + $0x74] sm:$0xf]
  %v344 = vld [vmem:[%s5 + $0x78] sm:$0xff]
  %v345 = vld [vmem:[%s5 + $0x80] sm:$0xf]
  %v346 = vld [vmem:[%s5 + $0x84] sm:$0xff]
  %v347 = vld [vmem:[%s5 + $0x8c] sm:$0xf]
  %v348 = vld [vmem:[%s5 + $0x90] sm:$0xff]
  %v349 = vld [vmem:[%s5 + $0x98] sm:$0xf]
  %v350 = vld [vmem:[%s5 + $0x9c] sm:$0xff]
  %v351 = vld [vmem:[%s5 + $0xa4] sm:$0xf]
  %v352 = vld [vmem:[%s5 + $0xa8] sm:$0xff]
  %v353 = vld [vmem:[%s5 + $0xb0] sm:$0xf]
  %v354 = vld [vmem:[%s5 + $0xb4] sm:$0xff]
  %v355 = vld [vmem:[%s5 + $0xbc] sm:$0xf]
  %v388 = vunpack.c.l.b16 %v324
  %v389 = vunpack.c.h.b16 %v324
  %v390 = vunpack.c.l.b16 %v325
  %v391 = vunpack.c.l.b16 %v326
  %v392 = vunpack.c.h.b16 %v326
  %v393 = vunpack.c.l.b16 %v327
  %v394 = vunpack.c.l.b16 %v328
  %v395 = vunpack.c.h.b16 %v328
  %v396 = vunpack.c.l.b16 %v329
  %v397 = vunpack.c.l.b16 %v330
  %v398 = vunpack.c.h.b16 %v330
  %v399 = vunpack.c.l.b16 %v331
  %v400 = vunpack.c.l.b16 %v332
  %v401 = vunpack.c.h.b16 %v332
  %v402 = vunpack.c.l.b16 %v333
  %v403 = vunpack.c.l.b16 %v334
  %v404 = vunpack.c.h.b16 %v334
  %v405 = vunpack.c.l.b16 %v335
  %v406 = vunpack.c.l.b16 %v336
  %v407 = vunpack.c.h.b16 %v336
  %v408 = vunpack.c.l.b16 %v337
  %v409 = vunpack.c.l.b16 %v338
  %v410 = vunpack.c.h.b16 %v338
  %v411 = vunpack.c.l.b16 %v339
  %v412 = vunpack.c.l.b16 %v340
  %v413 = vunpack.c.h.b16 %v340
  %v414 = vunpack.c.l.b16 %v341
  %v415 = vunpack.c.l.b16 %v342
  %v416 = vunpack.c.h.b16 %v342
  %v417 = vunpack.c.l.b16 %v343
  %v418 = vunpack.c.l.b16 %v344
  %v419 = vunpack.c.h.b16 %v344
  %v420 = vunpack.c.l.b16 %v345
  %v421 = vunpack.c.l.b16 %v346
  %v422 = vunpack.c.h.b16 %v346
  %v423 = vunpack.c.l.b16 %v347
  %v424 = vunpack.c.l.b16 %v348
  %v425 = vunpack.c.h.b16 %v348
  %v426 = vunpack.c.l.b16 %v349
  %v427 = vunpack.c.l.b16 %v350
  %v428 = vunpack.c.h.b16 %v350
  %v429 = vunpack.c.l.b16 %v351
  %v430 = vunpack.c.l.b16 %v352
  %v431 = vunpack.c.h.b16 %v352
  %v432 = vunpack.c.l.b16 %v353
  %v433 = vunpack.c.l.b16 %v354
  %v434 = vunpack.c.h.b16 %v354
  %v435 = vunpack.c.l.b16 %v355
  %v436 = vpack.c.b16 %v391, %v388
  %v437 = vpack.c.b16 %v392, %v389
  %v438 = vpack.c.b16 %v393, %v390
  %v439 = vpack.c.b16 %v397, %v394
  %v440 = vpack.c.b16 %v398, %v395
  %v441 = vpack.c.b16 %v399, %v396
  %v442 = vpack.c.b16 %v403, %v400
  %v443 = vpack.c.b16 %v404, %v401
  %v444 = vpack.c.b16 %v405, %v402
  %v445 = vpack.c.b16 %v409, %v406
  %v446 = vpack.c.b16 %v410, %v407
  %v447 = vpack.c.b16 %v411, %v408
  %v448 = vpack.c.b16 %v415, %v412
  %v449 = vpack.c.b16 %v416, %v413
  %v450 = vpack.c.b16 %v417, %v414
  %v451 = vpack.c.b16 %v421, %v418
  %v452 = vpack.c.b16 %v422, %v419
  %v453 = vpack.c.b16 %v423, %v420
  %v454 = vpack.c.b16 %v427, %v424
  %v455 = vpack.c.b16 %v428, %v425
  %v456 = vpack.c.b16 %v429, %v426
  %v457 = vpack.c.b16 %v433, %v430
  %v458 = vpack.c.b16 %v434, %v431
  %v459 = vpack.c.b16 %v435, %v432
  %484 = vmatprep.subr.bf16.mxu0 %v437
  %485 = vmatpush1.bf16.msra.mxu0 %v436
  %486 = vmatprep.subr.bf16.mxu0 %v440
  %487 = vmatpush1.bf16.msra.mxu0 %v439
  %488 = vmatprep.subr.bf16.mxu0 %v443
  %489 = vmatpush1.bf16.msra.mxu0 %v442
  %490 = vmatprep.subr.bf16.mxu0 %v446
  %491 = vmatpush1.bf16.msra.mxu0 %v445
  %492 = vmatprep.subr.bf16.mxu0 %v449
  %493 = vmatpush1.bf16.msra.mxu0 %v448
  %494 = vmatprep.subr.bf16.mxu0 %v452
  %495 = vmatpush1.bf16.msra.mxu0 %v451
  %496 = vmatprep.subr.bf16.mxu0 %v455
  %497 = vmatpush1.bf16.msra.mxu0 %v454
  %498 = vmatprep.subr.bf16.mxu0 %v458
  %499 = vmatpush1.bf16.msra.mxu0 %v457
  %500 = vmatprep.subr.bf16.mxu0 0
  %501 = vmatpush1.bf16.msra.mxu0 0
  %502 = vmatprep.subr.bf16.mxu0 0
  %503 = vmatpush1.bf16.msra.mxu0 0
  %504 = vmatprep.subr.bf16.mxu0 0
  %505 = vmatpush1.bf16.msra.mxu0 0
  %506 = vmatprep.subr.bf16.mxu0 0
  %507 = vmatpush1.bf16.msra.mxu0 0
  %508 = vmatprep.subr.bf16.mxu0 0
  %509 = vmatpush1.bf16.msra.mxu0 0
  %510 = vmatprep.subr.bf16.mxu0 0
  %511 = vmatpush1.bf16.msra.mxu0 0
  %512 = vmatprep.subr.bf16.mxu0 0
  %513 = vmatpush1.bf16.msra.mxu0 0
  %514 = vmatprep.subr.bf16.mxu0 0
  %515 = vmatpush1.bf16.msra.mxu0 0
  %516 = vmatprep.mubr.bf16.mxu0 0
  %517 = vmatmul.mubr.bf16.gmra.mrb[0].mxu0 %v323
  %v518 = vpop.f32.mrb[0].mxu0
  %v519 = vadd.f32 0.0, %v518
  %v520 = vpop.f32.mrb[0].mxu0
  %v521 = vadd.f32 0.0, %v520
  %v522 = vpop.f32.mrb[0].mxu0
  %v523 = vpop.f32.mrb[0].mxu0
  %524 = vdwg.mxu0
  %525 = vmatprep.subr.bf16.mxu0 0
  %526 = vmatpush1.bf16.msra.mxu0 %v438
  %527 = vmatprep.subr.bf16.mxu0 0
  %528 = vmatpush1.bf16.msra.mxu0 %v441
  %529 = vmatprep.subr.bf16.mxu0 0
  %530 = vmatpush1.bf16.msra.mxu0 %v444
  %531 = vmatprep.subr.bf16.mxu0 0
  %532 = vmatpush1.bf16.msra.mxu0 %v447
  %533 = vmatprep.subr.bf16.mxu0 0
  %534 = vmatpush1.bf16.msra.mxu0 %v450
  %535 = vmatprep.subr.bf16.mxu0 0
  %536 = vmatpush1.bf16.msra.mxu0 %v453
  %537 = vmatprep.subr.bf16.mxu0 0
  %538 = vmatpush1.bf16.msra.mxu0 %v456
  %539 = vmatprep.subr.bf16.mxu0 0
  %540 = vmatpush1.bf16.msra.mxu0 %v459
  %541 = vmatprep.subr.bf16.mxu0 0
  %542 = vmatpush1.bf16.msra.mxu0 0
  %543 = vmatprep.subr.bf16.mxu0 0
  %544 = vmatpush1.bf16.msra.mxu0 0
  %545 = vmatprep.subr.bf16.mxu0 0
  %546 = vmatpush1.bf16.msra.mxu0 0
  %547 = vmatprep.subr.bf16.mxu0 0
  %548 = vmatpush1.bf16.msra.mxu0 0
  %549 = vmatprep.subr.bf16.mxu0 0
  %550 = vmatpush1.bf16.msra.mxu0 0
  %551 = vmatprep.subr.bf16.mxu0 0
  %552 = vmatpush1.bf16.msra.mxu0 0
  %553 = vmatprep.subr.bf16.mxu0 0
  %554 = vmatpush1.bf16.msra.mxu0 0
  %555 = vmatprep.subr.bf16.mxu0 0
  %556 = vmatpush1.bf16.msra.mxu0 0
  %557 = vmatprep.mubr.bf16.mxu0 0
  %558 = vmatmul.mubr.bf16.gmra.mrb[0].mxu0 %v323
  %v559 = vpop.f32.mrb[0].mxu0
  %v560 = vadd.f32 0.0, %v559
  %v561 = vpop.f32.mrb[0].mxu0
  %v562 = vpop.f32.mrb[0].mxu0
  %v563 = vpop.f32.mrb[0].mxu0
  %564 = vdwg.mxu0
  %v565 = vmax.f32 %v519, %v521
  %v566 = vmax.f32 %v565, %v560
  %567 = vst [vmem:[%s6] sm:$0x3] %v566
  // Predicated region
  $region26: #{forward.1} parent=0 // pred_check
    _
  $region27: #{forward.1} parent=0 // pred_check_branch
    %569 = sbr.rel (0) target = $region29
  $region28: #{forward.1} parent=0 // pred_region
    _
  $region29: #{forward.1} parent=0 // pred_fallthru
    _
  // Predicated region
  $region30: #{forward.1} parent=0 // pred_check
    _
  $region31: #{forward.1} parent=0 // pred_check_branch
    %571 = sbr.rel (0) target = $region33
  $region32: #{forward.1} parent=0 // pred_region
    _
  $region33: #{forward.1} parent=0 // pred_fallthru
    _

</llo_original>
